<compile_context>
chip_gen: v6e
topology: v6e:2x2x1
jax: 0.10.0
libtpu: 0.0.40
codegen_flags: <defaults>
</compile_context>

<pallas_src>
import numpy as np
import jax
import jax.numpy as jnp
from jax.experimental import pallas as pl
from jax.experimental.pallas import tpu as pltpu


# ----------------------------------------------------------------------------
# Pallas kernel: one batch-block (NB batch elements folded into lanes) per step.
# ----------------------------------------------------------------------------
def maskgen_kernel(xc_ref, w3_ref, bnb_ref, pool_ref, wd_ref, bd_ref, o_ref):
    # xc_ref:   (1, 9*Cin, NB*H*W)  bf16  im2col'ed padded input (tap-major rows)
    # w3_ref:   (Cmid, 9*Cin)       bf16  dense grouped-3x3 weights, BN scale folded
    # bnb_ref:  (Cmid, 1)           f32   folded BN shift (beta - mean*scale)
    # pool_ref: (H*W, m*m)          bf16  SHARED adaptive-avg-pool matrix (no kron)
    # wd_ref:   (G, Cmid)           f32   fc "difference" weights (idx1 - idx0)
    # bd_ref:   (G, 1)              f32   fc "difference" bias
    # o_ref:    (1, G, NB*m*m)      f32   hard gates (index-1 selection)
    hw, mm = pool_ref.shape
    nb = xc_ref.shape[-1] // hw

    # Grouped 3x3 conv (+ folded BN scale) as a single lane-dense matmul (MXU):
    #   (Cmid, 9*Cin) @ (9*Cin, NB*H*W) -> (Cmid, NB*H*W), f32 accumulation.
    acc = jnp.dot(w3_ref[...], xc_ref[0], preferred_element_type=jnp.float32)

    # BN shift + ReLU (VPU, per-sublane broadcast), bf16 for the pool matmuls.
    y = jnp.maximum(acc + bnb_ref[...], 0.0).astype(jnp.bfloat16)

    # Per-batch-element adaptive average pool + folded 2-way fc gate.  The loop
    # is statically unrolled; every slice start n*hw is a compile-time constant
    # (a multiple of 128 whenever H*W is), so slices are aligned lane windows.
    gates = []
    for n in range(nb):
        y_n = y[:, n * hw:(n + 1) * hw]                         # (Cmid, H*W)
        pooled = jnp.dot(y_n, pool_ref[...],
                         preferred_element_type=jnp.float32)    # (Cmid, m*m)
        # Grouped 1x1 conv folded to a single "logit1 - logit0" projection.
        diff = jnp.dot(wd_ref[...], pooled,
                       preferred_element_type=jnp.float32) + bd_ref[...]  # (G, m*m)
        # Hard Gumbel-softmax (eval mode, force_hard=True): argmax over the
        # 2-way dim, take index 1  ==  float(logit_1 > logit_0).
        # NOTE: exact ties resolve to 0 (matches reference); near-ties may
        #       differ by ULPs from the folded bf16 path.
        gates.append((diff > 0.0).astype(jnp.float32))

    # Single store of the full (G, NB*m*m) slab (unmasked vst when NB*m*m is a
    # multiple of 128; absolute output bytes are tiny either way).
    o_ref[0] = jnp.concatenate(gates, axis=-1)


# ----------------------------------------------------------------------------
# Parameter construction (deterministic, mirrors nn.Module __init__ shapes).
# ----------------------------------------------------------------------------
def build_params(key, groups, inplanes):
    cmid = groups * 4
    cout_fc = groups * 2
    cin_g = inplanes // groups
    k1, k2, k3, k4, k5, k6 = jax.random.split(key, 6)
    params = dict(
        # Conv2d(inplanes, groups*4, 3, pad=1, groups=groups, bias=False)
        w_conv=0.2 * jax.random.normal(k1, (cmid, cin_g, 3, 3), jnp.float32),
        # BatchNorm2d(groups*4)
        gamma=1.0 + 0.1 * jax.random.normal(k2, (cmid,), jnp.float32),
        beta=0.1 * jax.random.normal(k3, (cmid,), jnp.float32),
        rmean=0.1 * jax.random.normal(k4, (cmid,), jnp.float32),
        rvar=1.0 + 0.5 * jax.random.uniform(k5, (cmid,), jnp.float32),
        # Conv2d(groups*4, groups*2, 1, groups=groups, bias=True),
        # bias initialized exactly as in the module: [0::2]=1.0, [1::2]=10.0
        w_fc=0.2 * jax.random.normal(k6, (cout_fc, 4, 1, 1), jnp.float32),
        b_fc=jnp.zeros((cout_fc,), jnp.float32).at[0::2].set(1.0)
                                               .at[1::2].set(10.0),
    )
    return params


def densify_grouped_conv3x3(w, groups, cin):
    # torch layout (cout, cin_g, 3, 3) -> dense (9, cin, cout), block-diagonal
    cout, cin_g = w.shape[0], w.shape[1]
    cout_g = cout // groups
    dense = jnp.zeros((3, 3, cin, cout), jnp.float32)
    for g in range(groups):
        blk = jnp.transpose(w[g * cout_g:(g + 1) * cout_g], (2, 3, 1, 0))
        dense = dense.at[:, :, g * cin_g:(g + 1) * cin_g,
                         g * cout_g:(g + 1) * cout_g].set(blk)
    return dense.reshape(9, cin, cout)


def densify_grouped_1x1(w, groups, cin):
    # torch layout (cout, cin_g, 1, 1) -> dense (cin, cout), block-diagonal,
    # columns in torch output-channel order (g0/idx0, g0/idx1, g1/idx0, ...)
    cout, cin_g = w.shape[0], w.shape[1]
    cout_g = cout // groups
    dense = jnp.zeros((cin, cout), jnp.float32)
    for g in range(groups):
        blk = w[g * cout_g:(g + 1) * cout_g, :, 0, 0]
        dense = dense.at[g * cin_g:(g + 1) * cin_g,
                         g * cout_g:(g + 1) * cout_g].set(blk.T)
    return dense


def build_pool_matrix(H, W, m):
    # AdaptiveAvgPool2d((m, m)) when H % m == 0 and W % m == 0, laid out as the
    # right-hand matmul operand: (H*W, m*m).  1/(kh*kw) is exact in bf16 for
    # power-of-two windows.
    kh, kw = H // m, W // m
    P = np.zeros((H * W, m * m), np.float32)
    for i in range(m):
        for j in range(m):
            for di in range(kh):
                for dj in range(kw):
                    P[(i * kh + di) * W + (j * kw + dj), i * m + j] = 1.0 / (kh * kw)
    return P


# ----------------------------------------------------------------------------
# Per-generation batch-fold heuristics.
# ----------------------------------------------------------------------------
def _default_lane_budget_and_min_blocks():
    # v5e/v6e: single TensorCore -> favor big per-step blocks (amortize the
    # ~0.35us/step pipeline overhead, push toward HBM roofline).
    # v7x: 2 TensorCores and 64 MiB physical VMEM -> smaller lane budget and
    # keep the grid length >= 2 so the "parallel" axis is sharded across cores.
    kind = ""
    try:
        kind = jax.devices()[0].device_kind.lower()
    except Exception:
        pass
    if "v7" in kind:
        return 8192, 2
    return 16384, 1


def _choose_batch_block(B, HW, mm, lane_budget, min_grid_blocks):
    divs = [d for d in range(1, B + 1) if B % d == 0 and d * HW <= lane_budget]
    if not divs:
        return 1

    def score(d):
        multi_blk = (B // d) >= min_grid_blocks   # keep >=2 grid steps on v7x
        lane_dense = d * mm >= 128                # pooled/fc/output lane width
        return (multi_blk, lane_dense, d)         # then largest block that fits

    return max(divs, key=score)


def _vmem_limit_bytes(Cin, Cmid, G, HW, mm, NB):
    bf, f4 = 2, 4
    blocks = (9 * Cin * NB * HW * bf        # xc (the only per-step varying block)
              + Cmid * 9 * Cin * bf         # w3
              + Cmid * f4                   # bnb
              + HW * mm * bf                # shared pool matrix
              + G * Cmid * f4 + G * f4      # wd, bd
              + G * NB * mm * f4)           # out
    inter = Cmid * NB * HW * (f4 + bf)      # acc (f32) + y (bf16) live together
    # 2x for double-buffered pipelining, 2x compile headroom, 32 MiB floor
    # (<= default/physical scoped VMEM on all of v5e/v6e/v7x).
    return int(min(max(4 * blocks + 2 * inter + (4 << 20), 32 << 20), 56 << 20))


# ----------------------------------------------------------------------------
# Wrapper: NCHW in, (B, groups, m, m) out.
# ----------------------------------------------------------------------------
def maskgen_forward(x_nchw, params, groups, mask_size, batch_block=None):
    B, Cin, H, W = x_nchw.shape
    Cmid = groups * 4
    G = groups
    m = mask_size
    HW = H * W
    mm = m * m
    # TODO(synk): PyTorch AdaptiveAvgPool2d handles non-divisible sizes with
    #             variable windows; this kernel assumes divisibility.
    assert H % m == 0 and W % m == 0, "adaptive pool assumes H, W divisible by mask_size"

    if batch_block is None:
        lane_budget, min_blocks = _default_lane_budget_and_min_blocks()
        batch_block = _choose_batch_block(B, HW, mm, lane_budget, min_blocks)
    NB = batch_block
    assert B % NB == 0
    nblk = B // NB

    # ---- im2col fully in bf16: (B, Cin, H, W) -> (nblk, 9*Cin, NB*H*W) -------
    x_pad = jnp.pad(x_nchw.astype(jnp.bfloat16), ((0, 0), (0, 0), (1, 1), (1, 1)))
    taps = [x_pad[:, :, dy:dy + H, dx:dx + W]
            for dy in range(3) for dx in range(3)]               # 9 x (B, Cin, H, W)
    x_col = (jnp.stack(taps, axis=1)                             # (B, 9, Cin, H, W)
                .reshape(nblk, NB, 9 * Cin, HW)
                .transpose(0, 2, 1, 3)                           # batch-fold on bf16
                .reshape(nblk, 9 * Cin, NB * HW))
    # TODO(synk): on v5e the 9x im2col HBM amplification could be avoided by
    #             DMA'ing the raw padded block and forming taps in-kernel with
    #             lane-offset slices / pltpu.roll; the single-matmul im2col form
    #             (preferred on v6e/v7x) is kept here.

    # ---- conv weights: densify, fold BN scale, bf16 --------------------------
    dense3 = densify_grouped_conv3x3(params['w_conv'], groups, Cin)   # (9, Cin, Cmid)
    scale = params['gamma'] / jnp.sqrt(params['rvar'] + 1e-5)         # (Cmid,)
    w3s = (dense3.reshape(9 * Cin, Cmid) * scale[None, :]).T.astype(jnp.bfloat16)
    bnb = (params['beta'] - params['rmean'] * scale).reshape(Cmid, 1).astype(jnp.float32)

    # ---- single shared pooling matrix (no NB^2 kron block-diagonal) ----------
    P = jnp.asarray(build_pool_matrix(H, W, m), dtype=jnp.bfloat16)   # (H*W, m*m)

    # ---- fc: fold the 2-way gate into difference weights ----------------------
    wfc = densify_grouped_1x1(params['w_fc'], groups, Cmid)           # (Cmid, 2G)
    w_diff = (wfc[:, 1::2] - wfc[:, 0::2]).T.astype(jnp.float32)      # (G, Cmid)
    b_diff = (params['b_fc'][1::2] - params['b_fc'][0::2]).reshape(G, 1).astype(jnp.float32)

    out = pl.pallas_call(
        maskgen_kernel,
        out_shape=jax.ShapeDtypeStruct((nblk, G, NB * mm), jnp.float32),
        grid_spec=pltpu.PrefetchScalarGridSpec(
            num_scalar_prefetch=0,
            grid=(nblk,),
            in_specs=[
                pl.BlockSpec((1, 9 * Cin, NB * HW), lambda b: (b, 0, 0)),
                pl.BlockSpec((Cmid, 9 * Cin), lambda b: (0, 0)),
                pl.BlockSpec((Cmid, 1), lambda b: (0, 0)),
                pl.BlockSpec((HW, mm), lambda b: (0, 0)),
                pl.BlockSpec((G, Cmid), lambda b: (0, 0)),
                pl.BlockSpec((G, 1), lambda b: (0, 0)),
            ],
            out_specs=pl.BlockSpec((1, G, NB * mm), lambda b: (b, 0, 0)),
        ),
        compiler_params=pltpu.CompilerParams(
            dimension_semantics=("parallel",),
            vmem_limit_bytes=_vmem_limit_bytes(Cin, Cmid, G, HW, mm, NB)),
    )(x_col, w3s, bnb, P, w_diff, b_diff)

    # (nblk, G, NB*m*m) -> (B, G, m, m)  (pure layout glue in the wrapper)
    gates = (out.reshape(nblk, G, NB, m, m)
                .transpose(0, 2, 1, 3, 4)
                .reshape(B, G, m, m))
    return gates


# ----------------------------------------------------------------------------
# Pure-JAX reference (same math, XLA convs, f32) for correctness checking.
# ----------------------------------------------------------------------------
def maskgen_reference(x_nchw, params, groups, mask_size):
    y = jax.lax.conv_general_dilated(
        x_nchw, params['w_conv'], (1, 1), 'SAME',
        dimension_numbers=('NCHW', 'OIHW', 'NCHW'),
        feature_group_count=groups)
    scale = params['gamma'] / jnp.sqrt(params['rvar'] + 1e-5)
    shift = params['beta'] - params['rmean'] * scale
    y = jnp.maximum(y * scale[None, :, None, None] + shift[None, :, None, None],
                    0.0)
    B, C, H, W = y.shape
    kh, kw = H // mask_size, W // mask_size
    y = y.reshape(B, C, mask_size, kh, mask_size, kw).mean(axis=(3, 5))
    z = jax.lax.conv_general_dilated(
        y, params['w_fc'], (1, 1), 'VALID',
        dimension_numbers=('NCHW', 'OIHW', 'NCHW'),
        feature_group_count=groups)
    z = z + params['b_fc'][None, :, None, None]
    z = z.reshape(B, groups, 2, mask_size, mask_size)
    return (z[:, :, 1] > z[:, :, 0]).astype(jnp.float32)


if __name__ == "__main__":
    B, inplanes, H, W = 2, 8, 16, 16
    groups, mask_size = 2, 4

    key = jax.random.PRNGKey(0)
    kx, kp = jax.random.split(key)
    x = jax.random.normal(kx, (B, inplanes, H, W), jnp.float32)
    params = build_params(kp, groups, inplanes)

    gates = maskgen_forward(x, params, groups, mask_size)
    gates = jax.block_until_ready(gates)

    ref = maskgen_reference(x, params, groups, mask_size)
    assert gates.shape == (B, groups, mask_size, mask_size)
    assert np.allclose(np.asarray(gates), np.asarray(ref)), "mismatch vs reference"

    print("KERNEL_OK")
</pallas_src>

<mosaic_0001>
module attributes {stable_mosaic.version = 11 : i64} {
  func.func @maskgen_kernel(%arg0: i32, %arg1: memref<1x72x512xbf16, #tpu.memory_space<vmem>>, %arg2: memref<8x72xbf16, #tpu.memory_space<vmem>>, %arg3: memref<8x1xf32, #tpu.memory_space<vmem>>, %arg4: memref<256x16xbf16, #tpu.memory_space<vmem>>, %arg5: memref<2x8xf32, #tpu.memory_space<vmem>>, %arg6: memref<2x1xf32, #tpu.memory_space<vmem>>, %arg7: memref<1x2x32xf32, #tpu.memory_space<vmem>>) attributes {dimension_semantics = [#tpu.dimension_semantics<parallel>], iteration_bounds = array<i64: 1>, scalar_prefetch = 0 : i64, scratch_operands = 0 : i64, tpu.core_type = #tpu.core_type<tc>, window_params = [{transform_indices = @transform_0, window_bounds = array<i64: 1, 72, 512>}, {pipeline_mode = #tpu.pipeline_mode<synchronous>, transform_indices = @transform_1, window_bounds = array<i64: 8, 72>}, {pipeline_mode = #tpu.pipeline_mode<synchronous>, transform_indices = @transform_2, window_bounds = array<i64: 8, 1>}, {pipeline_mode = #tpu.pipeline_mode<synchronous>, transform_indices = @transform_3, window_bounds = array<i64: 256, 16>}, {pipeline_mode = #tpu.pipeline_mode<synchronous>, transform_indices = @transform_4, window_bounds = array<i64: 2, 8>}, {pipeline_mode = #tpu.pipeline_mode<synchronous>, transform_indices = @transform_5, window_bounds = array<i64: 2, 1>}, {transform_indices = @transform_6, window_bounds = array<i64: 1, 2, 32>}]} {
    %c0 = arith.constant 0 : index
    %c0_0 = arith.constant 0 : index
    %0 = vector.load %arg2[%c0, %c0_0] : memref<8x72xbf16, #tpu.memory_space<vmem>>, vector<8x72xbf16>
    %c0_1 = arith.constant 0 : index
    %c0_2 = arith.constant 0 : index
    %c0_3 = arith.constant 0 : index
    %1 = vector.load %arg1[%c0_1, %c0_2, %c0_3] : memref<1x72x512xbf16, #tpu.memory_space<vmem>>, vector<1x72x512xbf16>
    %2 = vector.shape_cast %1 : vector<1x72x512xbf16> to vector<72x512xbf16>
    %cst = arith.constant dense<0.000000e+00> : vector<8x512xf32>
    %3 = tpu.matmul %0, %2, %cst {dimension_numbers = #tpu.dot_dimension_numbers<[1], [0], [0], [1], [0, 0, 1, 1], [], []>} : vector<8x72xbf16>, vector<72x512xbf16>, vector<8x512xf32> -> vector<8x512xf32>
    %c0_4 = arith.constant 0 : index
    %c0_5 = arith.constant 0 : index
    %4 = vector.load %arg3[%c0_4, %c0_5] : memref<8x1xf32, #tpu.memory_space<vmem>>, vector<8x1xf32>
    %5 = vector.broadcast %4 : vector<8x1xf32> to vector<8x512xf32>
    %6 = arith.addf %3, %5 : vector<8x512xf32>
    %cst_6 = arith.constant 0.000000e+00 : f32
    %7 = vector.broadcast %cst_6 : f32 to vector<8x512xf32>
    %8 = arith.maximumf %6, %7 : vector<8x512xf32>
    %9 = arith.truncf %8 : vector<8x512xf32> to vector<8x512xbf16>
    %10 = vector.extract_strided_slice %9 {offsets = [0, 0], sizes = [8, 256], strides = [1, 1]} : vector<8x512xbf16> to vector<8x256xbf16>
    %c0_7 = arith.constant 0 : index
    %c0_8 = arith.constant 0 : index
    %11 = vector.load %arg4[%c0_7, %c0_8] : memref<256x16xbf16, #tpu.memory_space<vmem>>, vector<256x16xbf16>
    %cst_9 = arith.constant dense<0.000000e+00> : vector<8x16xf32>
    %12 = tpu.matmul %10, %11, %cst_9 {dimension_numbers = #tpu.dot_dimension_numbers<[1], [0], [0], [1], [0, 0, 1, 1], [], []>} : vector<8x256xbf16>, vector<256x16xbf16>, vector<8x16xf32> -> vector<8x16xf32>
    %c0_10 = arith.constant 0 : index
    %c0_11 = arith.constant 0 : index
    %13 = vector.load %arg5[%c0_10, %c0_11] : memref<2x8xf32, #tpu.memory_space<vmem>>, vector<2x8xf32>
    %cst_12 = arith.constant dense<0.000000e+00> : vector<2x16xf32>
    %14 = tpu.matmul %13, %12, %cst_12 {dimension_numbers = #tpu.dot_dimension_numbers<[1], [0], [0], [1], [0, 0, 1, 1], [], []>} : vector<2x8xf32>, vector<8x16xf32>, vector<2x16xf32> -> vector<2x16xf32>
    %c0_13 = arith.constant 0 : index
    %c0_14 = arith.constant 0 : index
    %15 = vector.load %arg6[%c0_13, %c0_14] : memref<2x1xf32, #tpu.memory_space<vmem>>, vector<2x1xf32>
    %16 = vector.broadcast %15 : vector<2x1xf32> to vector<2x16xf32>
    %17 = arith.addf %14, %16 : vector<2x16xf32>
    %cst_15 = arith.constant 0.000000e+00 : f32
    %18 = vector.broadcast %cst_15 : f32 to vector<2x16xf32>
    %19 = arith.cmpf ogt, %17, %18 : vector<2x16xf32>
    %20 = arith.extui %19 : vector<2x16xi1> to vector<2x16xi32>
    %21 = arith.sitofp %20 : vector<2x16xi32> to vector<2x16xf32>
    %22 = vector.extract_strided_slice %9 {offsets = [0, 256], sizes = [8, 256], strides = [1, 1]} : vector<8x512xbf16> to vector<8x256xbf16>
    %c0_16 = arith.constant 0 : index
    %c0_17 = arith.constant 0 : index
    %23 = vector.load %arg4[%c0_16, %c0_17] : memref<256x16xbf16, #tpu.memory_space<vmem>>, vector<256x16xbf16>
    %cst_18 = arith.constant dense<0.000000e+00> : vector<8x16xf32>
    %24 = tpu.matmul %22, %23, %cst_18 {dimension_numbers = #tpu.dot_dimension_numbers<[1], [0], [0], [1], [0, 0, 1, 1], [], []>} : vector<8x256xbf16>, vector<256x16xbf16>, vector<8x16xf32> -> vector<8x16xf32>
    %c0_19 = arith.constant 0 : index
    %c0_20 = arith.constant 0 : index
    %25 = vector.load %arg5[%c0_19, %c0_20] : memref<2x8xf32, #tpu.memory_space<vmem>>, vector<2x8xf32>
    %cst_21 = arith.constant dense<0.000000e+00> : vector<2x16xf32>
    %26 = tpu.matmul %25, %24, %cst_21 {dimension_numbers = #tpu.dot_dimension_numbers<[1], [0], [0], [1], [0, 0, 1, 1], [], []>} : vector<2x8xf32>, vector<8x16xf32>, vector<2x16xf32> -> vector<2x16xf32>
    %c0_22 = arith.constant 0 : index
    %c0_23 = arith.constant 0 : index
    %27 = vector.load %arg6[%c0_22, %c0_23] : memref<2x1xf32, #tpu.memory_space<vmem>>, vector<2x1xf32>
    %28 = vector.broadcast %27 : vector<2x1xf32> to vector<2x16xf32>
    %29 = arith.addf %26, %28 : vector<2x16xf32>
    %cst_24 = arith.constant 0.000000e+00 : f32
    %30 = vector.broadcast %cst_24 : f32 to vector<2x16xf32>
    %31 = arith.cmpf ogt, %29, %30 : vector<2x16xf32>
    %32 = arith.extui %31 : vector<2x16xi1> to vector<2x16xi32>
    %33 = arith.sitofp %32 : vector<2x16xi32> to vector<2x16xf32>
    %34 = tpu.concatenate %21, %33 in 1 : vector<2x16xf32>, vector<2x16xf32> -> vector<2x32xf32>
    %c0_25 = arith.constant 0 : index
    %c0_26 = arith.constant 0 : index
    %c0_27 = arith.constant 0 : index
    %35 = vector.load %arg7[%c0_25, %c0_26, %c0_27] : memref<1x2x32xf32, #tpu.memory_space<vmem>>, vector<1x2x32xf32>
    %36 = vector.shape_cast %35 : vector<1x2x32xf32> to vector<2x32xf32>
    %37 = vector.shape_cast %34 : vector<2x32xf32> to vector<1x2x32xf32>
    tpu.vector_store %arg7[%c0_25, %c0_26, %c0_27], %37 {strides = array<i32>} : memref<1x2x32xf32, #tpu.memory_space<vmem>>, vector<1x2x32xf32>,
    return
  }
  func.func @transform_0(%arg0: i32) -> (i32, i32, i32) {
    %c0_i32 = arith.constant 0 : i32
    %c0_i32_0 = arith.constant 0 : i32
    %c0_i32_1 = arith.constant 0 : i32
    return %arg0, %c0_i32, %c0_i32_0 : i32, i32, i32
  }
  func.func @transform_1(%arg0: i32) -> (i32, i32) {
    %c0_i32 = arith.constant 0 : i32
    %c0_i32_0 = arith.constant 0 : i32
    %c0_i32_1 = arith.constant 0 : i32
    return %c0_i32, %c0_i32_0 : i32, i32
  }
  func.func @transform_2(%arg0: i32) -> (i32, i32) {
    %c0_i32 = arith.constant 0 : i32
    %c0_i32_0 = arith.constant 0 : i32
    %c0_i32_1 = arith.constant 0 : i32
    return %c0_i32, %c0_i32_0 : i32, i32
  }
  func.func @transform_3(%arg0: i32) -> (i32, i32) {
    %c0_i32 = arith.constant 0 : i32
    %c0_i32_0 = arith.constant 0 : i32
    %c0_i32_1 = arith.constant 0 : i32
    return %c0_i32, %c0_i32_0 : i32, i32
  }
  func.func @transform_4(%arg0: i32) -> (i32, i32) {
    %c0_i32 = arith.constant 0 : i32
    %c0_i32_0 = arith.constant 0 : i32
    %c0_i32_1 = arith.constant 0 : i32
    return %c0_i32, %c0_i32_0 : i32, i32
  }
  func.func @transform_5(%arg0: i32) -> (i32, i32) {
    %c0_i32 = arith.constant 0 : i32
    %c0_i32_0 = arith.constant 0 : i32
    %c0_i32_1 = arith.constant 0 : i32
    return %c0_i32, %c0_i32_0 : i32, i32
  }
  func.func @transform_6(%arg0: i32) -> (i32, i32, i32) {
    %c0_i32 = arith.constant 0 : i32
    %c0_i32_0 = arith.constant 0 : i32
    %c0_i32_1 = arith.constant 0 : i32
    return %arg0, %c0_i32, %c0_i32_0 : i32, i32, i32
  }
}

</mosaic_0001>

<llo_original>
// kernel: tpu_custom_call.1
$region0: #{tpu_custom_call.1}
  #allocation0 [shape = 'u32[]', space=smem, size = 0x4, offset = 0x4, fixed_abs, tag = 'smem constant byte address 0x4 - core index']
  #allocation1 [shape = 'u32[144,128]{1,0:T(1,128)}', space=vmem, size = 0x12000, scoped, tag = 'internal scratch']
  %s0 = inlined_call_operand.vmem [shape: bf16[1,72,512], index: 0, kind: input, shape index: {}]
  %s1 = inlined_call_operand.hbm [shape: bf16[8,72], index: 1, kind: input, shape index: {}]
  %s2 = inlined_call_operand.vmem [shape: f32[8,1], index: 2, kind: input, shape index: {}]
  %s3 = inlined_call_operand.vmem [shape: bf16[256,16], index: 3, kind: input, shape index: {}]
  %s4 = inlined_call_operand.vmem [shape: f32[2,8], index: 4, kind: input, shape index: {}]
  %s5 = inlined_call_operand.vmem [shape: f32[2,1], index: 5, kind: input, shape index: {}]
  %s6 = inlined_call_operand.hbm [shape: f32[1,2,32], index: 6, kind: output, shape index: {}]
  %s7 = sld [smem:[#allocation0]]
  $region38: #{tpu_custom_call.1} parent=0
    _
  %s9 = ssub.s32 1, %s7
  %s10 = scalar_select 0, %s9, %s7
  $region1: #{tpu_custom_call.1} parent=0
    #allocation2 [shape = 'u8[2048]{0}', space=vmem, size = 0x800, scoped, tag = 'input window, operand 1, single buffered']
    #allocation3 [shape = 's32[1]{0}', space=sflag, size = 0x4, scoped, tag = 'scoped memory for tpu_custom_call.1']
    #allocation4 [shape = 's32[1]{0}', space=sflag, size = 0x4, scoped, tag = 'scoped memory for tpu_custom_call.1']
    #allocation5 [shape = 'u8[1024]{0}', space=vmem, size = 0x400, scoped, tag = 'output window, operand 0, single buffered']
    %11 = vsyncpa [#allocation3], 0
    %12 = vsyncpa [#allocation4], 0
    // Predicated region
    $region2: #{tpu_custom_call.1} parent=1 // pred_check
      _
    $region3: #{tpu_custom_call.1} parent=1 // pred_check_branch
      %14 = sbr.rel (0) target = $region5
    $region4: #{tpu_custom_call.1} parent=1 // pred_region
      _
    $region5: #{tpu_custom_call.1} parent=1 // pred_fallthru
      _
    // Predicated region
    $region6: #{tpu_custom_call.1} parent=1 // pred_check
      _
    $region7: #{tpu_custom_call.1} parent=1 // pred_check_branch
      %16 = sbr.rel (0) target = $region9
    $region8: #{tpu_custom_call.1} parent=1 // pred_region
      %s18 = ssub.s32 64, 64
      %19 = vsyncadd [#allocation3], %s18
      %s21 = sshll.u32 [#allocation2], 4
      %s22 = int_to_ptr.vmem [resolvable:$true] %s21
      %24 = dma.hbm_to_vmem [thread:$0]  %s1, 64, %s22, [#allocation3]
    $region9: #{tpu_custom_call.1} parent=1 // pred_fallthru
      _
    // Predicated region
    $region10: #{tpu_custom_call.1} parent=1 // pred_check
      _
    $region11: #{tpu_custom_call.1} parent=1 // pred_check_branch
      %26 = sbr.rel (0) target = $region13
    $region12: #{tpu_custom_call.1} parent=1 // pred_region
      _
    $region13: #{tpu_custom_call.1} parent=1 // pred_fallthru
      _
    // Predicated region
    $region14: #{tpu_custom_call.1} parent=1 // pred_check
      _
    $region15: #{tpu_custom_call.1} parent=1 // pred_check_branch
      %28 = sbr.rel (0) target = $region17
    $region16: #{tpu_custom_call.1} parent=1 // pred_region
      _
    $region17: #{tpu_custom_call.1} parent=1 // pred_fallthru
      _
    // Predicated region
    $region18: #{tpu_custom_call.1} parent=1 // pred_check
      _
    $region19: #{tpu_custom_call.1} parent=1 // pred_check_branch
      %30 = sbr.rel (0) target = $region21
    $region20: #{tpu_custom_call.1} parent=1 // pred_region
      _
    $region21: #{tpu_custom_call.1} parent=1 // pred_fallthru
      _
    // Predicated region
    $region22: #{tpu_custom_call.1} parent=1 // pred_check
      _
    $region23: #{tpu_custom_call.1} parent=1 // pred_check_branch
      %32 = sbr.rel (0) target = $region25
    $region24: #{tpu_custom_call.1} parent=1 // pred_region
      _
    $region25: #{tpu_custom_call.1} parent=1 // pred_fallthru
      _
    // Predicated region
    $region26: #{tpu_custom_call.1} parent=1 // pred_check
      _
    $region27: #{tpu_custom_call.1} parent=1 // pred_check_branch
      %34 = sbr.rel (0) target = $region29
    $region28: #{tpu_custom_call.1} parent=1 // pred_region
      %35 = dma.done [#allocation3], 64
    $region29: #{tpu_custom_call.1} parent=1 // pred_fallthru
      _
    %v37 = vld [vmem:[#allocation2] sm:$0xf]
    %v38 = vld [vmem:[%s0] sm:$0xff]
    %v39 = vld [vmem:[%s0 + $0x8] sm:$0xff]
    %v40 = vld [vmem:[%s0 + $0x10] sm:$0xff]
    %v41 = vld [vmem:[%s0 + $0x18] sm:$0xff]
    %v42 = vld [vmem:[%s0 + $0x20] sm:$0xff]
    %v43 = vld [vmem:[%s0 + $0x28] sm:$0xff]
    %v44 = vld [vmem:[%s0 + $0x30] sm:$0xff]
    %v45 = vld [vmem:[%s0 + $0x38] sm:$0xff]
    %v46 = vld [vmem:[%s0 + $0x40] sm:$0xff]
    %v47 = vld [vmem:[%s0 + $0x48] sm:$0xff]
    %v48 = vld [vmem:[%s0 + $0x50] sm:$0xff]
    %v49 = vld [vmem:[%s0 + $0x58] sm:$0xff]
    %v50 = vld [vmem:[%s0 + $0x60] sm:$0xff]
    %v51 = vld [vmem:[%s0 + $0x68] sm:$0xff]
    %v52 = vld [vmem:[%s0 + $0x70] sm:$0xff]
    %v53 = vld [vmem:[%s0 + $0x78] sm:$0xff]
    %v54 = vld [vmem:[%s0 + $0x80] sm:$0xff]
    %v55 = vld [vmem:[%s0 + $0x88] sm:$0xff]
    %v56 = vld [vmem:[%s2] sm:$0xff]
    %58 = vset.pattern.permute.xlu0 0
    %59 = vperm.xlu0 %58, %v56
    %v60 = vpop.permute.xlu0 %59
    %v80 = vunpack.c.l.b16 %v38
    %v81 = vunpack.c.h.b16 %v38
    %v82 = vunpack.c.l.b16 %v39
    %v83 = vunpack.c.h.b16 %v39
    %v84 = vunpack.c.l.b16 %v40
    %v85 = vunpack.c.h.b16 %v40
    %v86 = vunpack.c.l.b16 %v41
    %v87 = vunpack.c.h.b16 %v41
    %v88 = vunpack.c.l.b16 %v42
    %v89 = vunpack.c.h.b16 %v42
    %v90 = vunpack.c.l.b16 %v43
    %v91 = vunpack.c.h.b16 %v43
    %v92 = vunpack.c.l.b16 %v44
    %v93 = vunpack.c.h.b16 %v44
    %v94 = vunpack.c.l.b16 %v45
    %v95 = vunpack.c.h.b16 %v45
    %v96 = vunpack.c.l.b16 %v46
    %v97 = vunpack.c.h.b16 %v46
    %v98 = vunpack.c.l.b16 %v47
    %v99 = vunpack.c.h.b16 %v47
    %v100 = vunpack.c.l.b16 %v48
    %v101 = vunpack.c.h.b16 %v48
    %v102 = vunpack.c.l.b16 %v49
    %v103 = vunpack.c.h.b16 %v49
    %v104 = vunpack.c.l.b16 %v50
    %v105 = vunpack.c.h.b16 %v50
    %v106 = vunpack.c.l.b16 %v51
    %v107 = vunpack.c.h.b16 %v51
    %v108 = vunpack.c.l.b16 %v52
    %v109 = vunpack.c.h.b16 %v52
    %v110 = vunpack.c.l.b16 %v53
    %v111 = vunpack.c.h.b16 %v53
    %v112 = vunpack.c.l.b16 %v54
    %v113 = vunpack.c.h.b16 %v54
    %v114 = vunpack.c.l.b16 %v55
    %v115 = vunpack.c.h.b16 %v55
    %v116 = vpack.c.b16 %v84, %v80
    %v117 = vpack.c.b16 %v85, %v81
    %v118 = vpack.c.b16 %v86, %v82
    %v119 = vpack.c.b16 %v87, %v83
    %v120 = vpack.c.b16 %v92, %v88
    %v121 = vpack.c.b16 %v93, %v89
    %v122 = vpack.c.b16 %v94, %v90
    %v123 = vpack.c.b16 %v95, %v91
    %v124 = vpack.c.b16 %v100, %v96
    %v125 = vpack.c.b16 %v101, %v97
    %v126 = vpack.c.b16 %v102, %v98
    %v127 = vpack.c.b16 %v103, %v99
    %v128 = vpack.c.b16 %v108, %v104
    %v129 = vpack.c.b16 %v109, %v105
    %v130 = vpack.c.b16 %v110, %v106
    %v131 = vpack.c.b16 %v111, %v107
    %v132 = vpack.c.b16 %v112, %v112
    %v133 = vpack.c.b16 %v113, %v113
    %v134 = vpack.c.b16 %v114, %v114
    %v135 = vpack.c.b16 %v115, %v115
    %vm152 = vcmask 588800
    %v154 = vsel %vm152, %v37, 0
    %vm156 = vcmask 1043456
    %v158 = vsel %vm156, %v132, 0
    %v161 = vsel %vm156, %v133, 0
    %v164 = vsel %vm156, %v134, 0
    %v167 = vsel %vm156, %v135, 0
    %169 = vmatprep.subr.bf16.mxu0 0
    %170 = vmatpush1.bf16.msra.mxu0 0
    %171 = vmatprep.subr.bf16.mxu0 0
    %172 = vmatpush1.bf16.msra.mxu0 0
    %173 = vmatprep.subr.bf16.mxu0 0
    %174 = vmatpush1.bf16.msra.mxu0 0
    %175 = vmatprep.subr.bf16.mxu0 %v161
    %176 = vmatpush1.bf16.msra.mxu0 %v158
    %177 = vmatprep.subr.bf16.mxu0 %v129
    %178 = vmatpush1.bf16.msra.mxu0 %v128
    %179 = vmatprep.subr.bf16.mxu0 %v125
    %180 = vmatpush1.bf16.msra.mxu0 %v124
    %181 = vmatprep.subr.bf16.mxu0 %v121
    %182 = vmatpush1.bf16.msra.mxu0 %v120
    %183 = vmatprep.subr.bf16.mxu0 %v117
    %184 = vmatpush1.bf16.msra.mxu0 %v116
    %185 = vmatprep.subr.bf16.mxu0 0
    %186 = vmatpush2.bf16.msra.mxu0 0
    %187 = vmatprep.subr.bf16.mxu0 0
    %188 = vmatpush2.bf16.msra.mxu0 0
    %189 = vmatprep.subr.bf16.mxu0 0
    %190 = vmatpush2.bf16.msra.mxu0 0
    %191 = vmatprep.subr.bf16.mxu0 0
    %192 = vmatpush2.bf16.msra.mxu0 0
    %193 = vmatprep.subr.bf16.mxu0 0
    %194 = vmatpush2.bf16.msra.mxu0 0
    %195 = vmatprep.subr.bf16.mxu0 0
    %196 = vmatpush2.bf16.msra.mxu0 0
    %197 = vmatprep.subr.bf16.mxu0 0
    %198 = vmatpush2.bf16.msra.mxu0 0
    %199 = vmatprep.subr.bf16.mxu0 0
    %200 = vmatpush2.bf16.msra.mxu0 0
    %201 = vmatprep.mubr.bf16.mxu0 0
    %202 = vmatmul.mubr.bf16.gmra.mxu0 %v154
    %v203 = vpop.f32.mrf.mxu0
    %v204 = vadd.f32 %v60, %v203
    %v205 = vpop.f32.mrf.mxu0
    %v206 = vadd.f32 %v60, %v205
    %v207 = vpop.f32.mrf.mxu0
    %v208 = vpop.f32.mrf.mxu0
    %209 = vdwg.mxu0
    %210 = vmatprep.subr.bf16.mxu0 0
    %211 = vmatpush1.bf16.msra.mxu0 0
    %212 = vmatprep.subr.bf16.mxu0 0
    %213 = vmatpush1.bf16.msra.mxu0 0
    %214 = vmatprep.subr.bf16.mxu0 0
    %215 = vmatpush1.bf16.msra.mxu0 0
    %216 = vmatprep.subr.bf16.mxu0 %v167
    %217 = vmatpush1.bf16.msra.mxu0 %v164
    %218 = vmatprep.subr.bf16.mxu0 %v131
    %219 = vmatpush1.bf16.msra.mxu0 %v130
    %220 = vmatprep.subr.bf16.mxu0 %v127
    %221 = vmatpush1.bf16.msra.mxu0 %v126
    %222 = vmatprep.subr.bf16.mxu0 %v123
    %223 = vmatpush1.bf16.msra.mxu0 %v122
    %224 = vmatprep.subr.bf16.mxu0 %v119
    %225 = vmatpush1.bf16.msra.mxu0 %v118
    %226 = vmatprep.subr.bf16.mxu0 0
    %227 = vmatpush2.bf16.msra.mxu0 0
    %228 = vmatprep.subr.bf16.mxu0 0
    %229 = vmatpush2.bf16.msra.mxu0 0
    %230 = vmatprep.subr.bf16.mxu0 0
    %231 = vmatpush2.bf16.msra.mxu0 0
    %232 = vmatprep.subr.bf16.mxu0 0
    %233 = vmatpush2.bf16.msra.mxu0 0
    %234 = vmatprep.subr.bf16.mxu0 0
    %235 = vmatpush2.bf16.msra.mxu0 0
    %236 = vmatprep.subr.bf16.mxu0 0
    %237 = vmatpush2.bf16.msra.mxu0 0
    %238 = vmatprep.subr.bf16.mxu0 0
    %239 = vmatpush2.bf16.msra.mxu0 0
    %240 = vmatprep.subr.bf16.mxu0 0
    %241 = vmatpush2.bf16.msra.mxu0 0
    %242 = vmatprep.mubr.bf16.mxu0 0
    %243 = vmatmul.mubr.bf16.gmra.mxu0 %v154
    %v244 = vpop.f32.mrf.mxu0
    %v245 = vadd.f32 %v60, %v244
    %v246 = vpop.f32.mrf.mxu0
    %v247 = vadd.f32 %v60, %v246
    %v248 = vpop.f32.mrf.mxu0
    %v249 = vpop.f32.mrf.mxu0
    %250 = vdwg.mxu0
    %v251 = vmax.f32 %v204, 0.0
    %v252 = vmax.f32 %v206, 0.0
    %v253 = vmax.f32 %v245, 0.0
    %v254 = vmax.f32 %v247, 0.0
    %v255 = vpack.c.bf16 %v251, %v251
    %v256 = vpack.c.bf16 %v252, %v252
    %v257 = vpack.c.bf16 %v253, %v253
    %v258 = vpack.c.bf16 %v254, %v254
    %v259 = vld [vmem:[%s3] sm:$0xf]
    %v260 = vld [vmem:[%s3 + $0x4] sm:$0xf]
    %v261 = vld [vmem:[%s3 + $0x8] sm:$0xf]
    %v262 = vld [vmem:[%s3 + $0xc] sm:$0xf]
    %v263 = vld [vmem:[%s3 + $0x10] sm:$0xf]
    %v264 = vld [vmem:[%s3 + $0x14] sm:$0xf]
    %v265 = vld [vmem:[%s3 + $0x18] sm:$0xf]
    %v266 = vld [vmem:[%s3 + $0x1c] sm:$0xf]
    %v267 = vld [vmem:[%s3 + $0x20] sm:$0xf]
    %v268 = vld [vmem:[%s3 + $0x24] sm:$0xf]
    %v269 = vld [vmem:[%s3 + $0x28] sm:$0xf]
    %v270 = vld [vmem:[%s3 + $0x2c] sm:$0xf]
    %v271 = vld [vmem:[%s3 + $0x30] sm:$0xf]
    %v272 = vld [vmem:[%s3 + $0x34] sm:$0xf]
    %v273 = vld [vmem:[%s3 + $0x38] sm:$0xf]
    %v274 = vld [vmem:[%s3 + $0x3c] sm:$0xf]
    %v275 = vld [vmem:[%s3 + $0x40] sm:$0xf]
    %v276 = vld [vmem:[%s3 + $0x44] sm:$0xf]
    %v277 = vld [vmem:[%s3 + $0x48] sm:$0xf]
    %v278 = vld [vmem:[%s3 + $0x4c] sm:$0xf]
    %v279 = vld [vmem:[%s3 + $0x50] sm:$0xf]
    %v280 = vld [vmem:[%s3 + $0x54] sm:$0xf]
    %v281 = vld [vmem:[%s3 + $0x58] sm:$0xf]
    %v282 = vld [vmem:[%s3 + $0x5c] sm:$0xf]
    %v283 = vld [vmem:[%s3 + $0x60] sm:$0xf]
    %v284 = vld [vmem:[%s3 + $0x64] sm:$0xf]
    %v285 = vld [vmem:[%s3 + $0x68] sm:$0xf]
    %v286 = vld [vmem:[%s3 + $0x6c] sm:$0xf]
    %v287 = vld [vmem:[%s3 + $0x70] sm:$0xf]
    %v288 = vld [vmem:[%s3 + $0x74] sm:$0xf]
    %v289 = vld [vmem:[%s3 + $0x78] sm:$0xf]
    %v290 = vld [vmem:[%s3 + $0x7c] sm:$0xf]
    %v323 = vunpack.c.l.b16 %v259
    %v324 = vunpack.c.l.b16 %v260
    %v325 = vunpack.c.l.b16 %v261
    %v326 = vunpack.c.l.b16 %v262
    %v327 = vunpack.c.l.b16 %v263
    %v328 = vunpack.c.l.b16 %v264
    %v329 = vunpack.c.l.b16 %v265
    %v330 = vunpack.c.l.b16 %v266
    %v331 = vunpack.c.l.b16 %v267
    %v332 = vunpack.c.l.b16 %v268
    %v333 = vunpack.c.l.b16 %v269
    %v334 = vunpack.c.l.b16 %v270
    %v335 = vunpack.c.l.b16 %v271
    %v336 = vunpack.c.l.b16 %v272
    %v337 = vunpack.c.l.b16 %v273
    %v338 = vunpack.c.l.b16 %v274
    %v339 = vunpack.c.l.b16 %v275
    %v340 = vunpack.c.l.b16 %v276
    %v341 = vunpack.c.l.b16 %v277
    %v342 = vunpack.c.l.b16 %v278
    %v343 = vunpack.c.l.b16 %v279
    %v344 = vunpack.c.l.b16 %v280
    %v345 = vunpack.c.l.b16 %v281
    %v346 = vunpack.c.l.b16 %v282
    %v347 = vunpack.c.l.b16 %v283
    %v348 = vunpack.c.l.b16 %v284
    %v349 = vunpack.c.l.b16 %v285
    %v350 = vunpack.c.l.b16 %v286
    %v351 = vunpack.c.l.b16 %v287
    %v352 = vunpack.c.l.b16 %v288
    %v353 = vunpack.c.l.b16 %v289
    %v354 = vunpack.c.l.b16 %v290
    %v355 = vpack.c.b16 %v324, %v323
    %v356 = vpack.c.b16 %v326, %v325
    %v357 = vpack.c.b16 %v328, %v327
    %v358 = vpack.c.b16 %v330, %v329
    %v359 = vpack.c.b16 %v332, %v331
    %v360 = vpack.c.b16 %v334, %v333
    %v361 = vpack.c.b16 %v336, %v335
    %v362 = vpack.c.b16 %v338, %v337
    %v363 = vpack.c.b16 %v340, %v339
    %v364 = vpack.c.b16 %v342, %v341
    %v365 = vpack.c.b16 %v344, %v343
    %v366 = vpack.c.b16 %v346, %v345
    %v367 = vpack.c.b16 %v348, %v347
    %v368 = vpack.c.b16 %v350, %v349
    %v369 = vpack.c.b16 %v352, %v351
    %v370 = vpack.c.b16 %v354, %v353
    %387 = vmatprep.subr.bf16.mxu0 0
    %388 = vmatpush1.bf16.msra.mxu0 %v362
    %389 = vmatprep.subr.bf16.mxu0 0
    %390 = vmatpush1.bf16.msra.mxu0 %v361
    %391 = vmatprep.subr.bf16.mxu0 0
    %392 = vmatpush1.bf16.msra.mxu0 %v360
    %393 = vmatprep.subr.bf16.mxu0 0
    %394 = vmatpush1.bf16.msra.mxu0 %v359
    %395 = vmatprep.subr.bf16.mxu0 0
    %396 = vmatpush1.bf16.msra.mxu0 %v358
    %397 = vmatprep.subr.bf16.mxu0 0
    %398 = vmatpush1.bf16.msra.mxu0 %v357
    %399 = vmatprep.subr.bf16.mxu0 0
    %400 = vmatpush1.bf16.msra.mxu0 %v356
    %401 = vmatprep.subr.bf16.mxu0 0
    %402 = vmatpush1.bf16.msra.mxu0 %v355
    %403 = vmatprep.subr.bf16.mxu0 0
    %404 = vmatpush2.bf16.msra.mxu0 %v370
    %405 = vmatprep.subr.bf16.mxu0 0
    %406 = vmatpush2.bf16.msra.mxu0 %v369
    %407 = vmatprep.subr.bf16.mxu0 0
    %408 = vmatpush2.bf16.msra.mxu0 %v368
    %409 = vmatprep.subr.bf16.mxu0 0
    %410 = vmatpush2.bf16.msra.mxu0 %v367
    %411 = vmatprep.subr.bf16.mxu0 0
    %412 = vmatpush2.bf16.msra.mxu0 %v366
    %413 = vmatprep.subr.bf16.mxu0 0
    %414 = vmatpush2.bf16.msra.mxu0 %v365
    %415 = vmatprep.subr.bf16.mxu0 0
    %416 = vmatpush2.bf16.msra.mxu0 %v364
    %417 = vmatprep.subr.bf16.mxu0 0
    %418 = vmatpush2.bf16.msra.mxu0 %v363
    %419 = vmatprep.mubr.bf16.mxu0 %v256
    %420 = vmatmul.mubr.bf16.gmra.mxu0 %v255
    %v421 = vpop.f32.mrf.mxu0
    %v422 = vadd.f32 0.0, %v421
    %v423 = vpop.f32.mrf.mxu0
    %v424 = vpop.f32.mrf.mxu0
    %v425 = vpop.f32.mrf.mxu0
    %426 = vdwg.mxu0
    %v427 = vld [vmem:[%s4] sm:$0x3]
    %v428 = vld [vmem:[%s5] sm:$0x3]
    %430 = vset.pattern.permute.xlu0 0
    %431 = vperm.xlu0 %430, %v428
    %v432 = vpop.permute.xlu0 %431
    %vm434 = vcmask 64512
    %v436 = vsel %vm434, %v427, 0
    %438 = vmatprep.subr.mxu0 0.0
    %439 = vmatpush1.msra.mxu0 0.0
    %440 = vmatprep.subr.mxu0 0.0
    %441 = vmatpush1.msra.mxu0 0.0
    %442 = vmatprep.subr.mxu0 0.0
    %443 = vmatpush1.msra.mxu0 0.0
    %444 = vmatprep.subr.mxu0 0.0
    %445 = vmatpush1.msra.mxu0 0.0
    %446 = vmatprep.subr.mxu0 0.0
    %447 = vmatpush1.msra.mxu0 0.0
    %448 = vmatprep.subr.mxu0 0.0
    %449 = vmatpush1.msra.mxu0 0.0
    %450 = vmatprep.subr.mxu0 0.0
    %451 = vmatpush1.msra.mxu0 0.0
    %452 = vmatprep.subr.mxu0 0.0
    %453 = vmatpush1.msra.mxu0 0.0
    %454 = vmatprep.subr.mxu0 0.0
    %455 = vmatpush1.msra.mxu0 0.0
    %456 = vmatprep.subr.mxu0 0.0
    %457 = vmatpush1.msra.mxu0 0.0
    %458 = vmatprep.subr.mxu0 0.0
    %459 = vmatpush1.msra.mxu0 0.0
    %460 = vmatprep.subr.mxu0 0.0
    %461 = vmatpush1.msra.mxu0 0.0
    %462 = vmatprep.subr.mxu0 0.0
    %463 = vmatpush1.msra.mxu0 0.0
    %464 = vmatprep.subr.mxu0 0.0
    %465 = vmatpush1.msra.mxu0 0.0
    %466 = vmatprep.subr.mxu0 0.0
    %467 = vmatpush1.msra.mxu0 0.0
    %468 = vmatprep.subr.mxu0 0.0
    %469 = vmatpush1.msra.mxu0 %v422
    %470 = vmatprep.subr.mxu0 0.0
    %471 = vmatpush2.msra.mxu0 0.0
    %472 = vmatprep.subr.mxu0 0.0
    %473 = vmatpush2.msra.mxu0 0.0
    %474 = vmatprep.subr.mxu0 0.0
    %475 = vmatpush2.msra.mxu0 0.0
    %476 = vmatprep.subr.mxu0 0.0
    %477 = vmatpush2.msra.mxu0 0.0
    %478 = vmatprep.subr.mxu0 0.0
    %479 = vmatpush2.msra.mxu0 0.0
    %480 = vmatprep.subr.mxu0 0.0
    %481 = vmatpush2.msra.mxu0 0.0
    %482 = vmatprep.subr.mxu0 0.0
    %483 = vmatpush2.msra.mxu0 0.0
    %484 = vmatprep.subr.mxu0 0.0
    %485 = vmatpush2.msra.mxu0 0.0
    %486 = vmatprep.subr.mxu0 0.0
    %487 = vmatpush2.msra.mxu0 0.0
    %488 = vmatprep.subr.mxu0 0.0
    %489 = vmatpush2.msra.mxu0 0.0
    %490 = vmatprep.subr.mxu0 0.0
    %491 = vmatpush2.msra.mxu0 0.0
    %492 = vmatprep.subr.mxu0 0.0
    %493 = vmatpush2.msra.mxu0 0.0
    %494 = vmatprep.subr.mxu0 0.0
    %495 = vmatpush2.msra.mxu0 0.0
    %496 = vmatprep.subr.mxu0 0.0
    %497 = vmatpush2.msra.mxu0 0.0
    %498 = vmatprep.subr.mxu0 0.0
    %499 = vmatpush2.msra.mxu0 0.0
    %500 = vmatprep.subr.mxu0 0.0
    %501 = vmatpush2.msra.mxu0 0.0
    %502 = vmatprep.mubr.f32.mxu0 0.0
    %503 = vmatmul.mubr.f32.gmra.mxu0 %v436
    %v504 = vpop.f32.mrf.mxu0
    %v505 = vadd.f32 %v432, %v504
    %v506 = vpop.f32.mrf.mxu0
    %507 = vdwg.mxu0
    %vm508 = vcmp.gt.f32.partialorder %v505, 0.0
    %v509 = vsel %vm508, 1, 0
    %v510 = vcvt.s32.f32 %v509
    %511 = vmatprep.subr.bf16.mxu0 0
    %512 = vmatpush1.bf16.msra.mxu0 %v362
    %513 = vmatprep.subr.bf16.mxu0 0
    %514 = vmatpush1.bf16.msra.mxu0 %v361
    %515 = vmatprep.subr.bf16.mxu0 0
    %516 = vmatpush1.bf16.msra.mxu0 %v360
    %517 = vmatprep.subr.bf16.mxu0 0
    %518 = vmatpush1.bf16.msra.mxu0 %v359
    %519 = vmatprep.subr.bf16.mxu0 0
    %520 = vmatpush1.bf16.msra.mxu0 %v358
    %521 = vmatprep.subr.bf16.mxu0 0
    %522 = vmatpush1.bf16.msra.mxu0 %v357
    %523 = vmatprep.subr.bf16.mxu0 0
    %524 = vmatpush1.bf16.msra.mxu0 %v356
    %525 = vmatprep.subr.bf16.mxu0 0
    %526 = vmatpush1.bf16.msra.mxu0 %v355
    %527 = vmatprep.subr.bf16.mxu0 0
    %528 = vmatpush2.bf16.msra.mxu0 %v370
    %529 = vmatprep.subr.bf16.mxu0 0
    %530 = vmatpush2.bf16.msra.mxu0 %v369
    %531 = vmatprep.subr.bf16.mxu0 0
    %532 = vmatpush2.bf16.msra.mxu0 %v368
    %533 = vmatprep.subr.bf16.mxu0 0
    %534 = vmatpush2.bf16.msra.mxu0 %v367
    %535 = vmatprep.subr.bf16.mxu0 0
    %536 = vmatpush2.bf16.msra.mxu0 %v366
    %537 = vmatprep.subr.bf16.mxu0 0
    %538 = vmatpush2.bf16.msra.mxu0 %v365
    %539 = vmatprep.subr.bf16.mxu0 0
    %540 = vmatpush2.bf16.msra.mxu0 %v364
    %541 = vmatprep.subr.bf16.mxu0 0
    %542 = vmatpush2.bf16.msra.mxu0 %v363
    %543 = vmatprep.mubr.bf16.mxu0 %v258
    %544 = vmatmul.mubr.bf16.gmra.mxu0 %v257
    %v545 = vpop.f32.mrf.mxu0
    %v546 = vadd.f32 0.0, %v545
    %v547 = vpop.f32.mrf.mxu0
    %v548 = vpop.f32.mrf.mxu0
    %v549 = vpop.f32.mrf.mxu0
    %550 = vdwg.mxu0
    %551 = vmatprep.subr.mxu0 0.0
    %552 = vmatpush1.msra.mxu0 0.0
    %553 = vmatprep.subr.mxu0 0.0
    %554 = vmatpush1.msra.mxu0 0.0
    %555 = vmatprep.subr.mxu0 0.0
    %556 = vmatpush1.msra.mxu0 0.0
    %557 = vmatprep.subr.mxu0 0.0
    %558 = vmatpush1.msra.mxu0 0.0
    %559 = vmatprep.subr.mxu0 0.0
    %560 = vmatpush1.msra.mxu0 0.0
    %561 = vmatprep.subr.mxu0 0.0
    %562 = vmatpush1.msra.mxu0 0.0
    %563 = vmatprep.subr.mxu0 0.0
    %564 = vmatpush1.msra.mxu0 0.0
    %565 = vmatprep.subr.mxu0 0.0
    %566 = vmatpush1.msra.mxu0 0.0
    %567 = vmatprep.subr.mxu0 0.0
    %568 = vmatpush1.msra.mxu0 0.0
    %569 = vmatprep.subr.mxu0 0.0
    %570 = vmatpush1.msra.mxu0 0.0
    %571 = vmatprep.subr.mxu0 0.0
    %572 = vmatpush1.msra.mxu0 0.0
    %573 = vmatprep.subr.mxu0 0.0
    %574 = vmatpush1.msra.mxu0 0.0
    %575 = vmatprep.subr.mxu0 0.0
    %576 = vmatpush1.msra.mxu0 0.0
    %577 = vmatprep.subr.mxu0 0.0
    %578 = vmatpush1.msra.mxu0 0.0
    %579 = vmatprep.subr.mxu0 0.0
    %580 = vmatpush1.msra.mxu0 0.0
    %581 = vmatprep.subr.mxu0 0.0
    %582 = vmatpush1.msra.mxu0 %v546
    %583 = vmatprep.subr.mxu0 0.0
    %584 = vmatpush2.msra.mxu0 0.0
    %585 = vmatprep.subr.mxu0 0.0
    %586 = vmatpush2.msra.mxu0 0.0
    %587 = vmatprep.subr.mxu0 0.0
    %588 = vmatpush2.msra.mxu0 0.0
    %589 = vmatprep.subr.mxu0 0.0
    %590 = vmatpush2.msra.mxu0 0.0
    %591 = vmatprep.subr.mxu0 0.0
    %592 = vmatpush2.msra.mxu0 0.0
    %593 = vmatprep.subr.mxu0 0.0
    %594 = vmatpush2.msra.mxu0 0.0
    %595 = vmatprep.subr.mxu0 0.0
    %596 = vmatpush2.msra.mxu0 0.0
    %597 = vmatprep.subr.mxu0 0.0
    %598 = vmatpush2.msra.mxu0 0.0
    %599 = vmatprep.subr.mxu0 0.0
    %600 = vmatpush2.msra.mxu0 0.0
    %601 = vmatprep.subr.mxu0 0.0
    %602 = vmatpush2.msra.mxu0 0.0
    %603 = vmatprep.subr.mxu0 0.0
    %604 = vmatpush2.msra.mxu0 0.0
    %605 = vmatprep.subr.mxu0 0.0
    %606 = vmatpush2.msra.mxu0 0.0
    %607 = vmatprep.subr.mxu0 0.0
    %608 = vmatpush2.msra.mxu0 0.0
    %609 = vmatprep.subr.mxu0 0.0
    %610 = vmatpush2.msra.mxu0 0.0
    %611 = vmatprep.subr.mxu0 0.0
    %612 = vmatpush2.msra.mxu0 0.0
    %613 = vmatprep.subr.mxu0 0.0
    %614 = vmatpush2.msra.mxu0 0.0
    %615 = vmatprep.mubr.f32.mxu0 0.0
    %616 = vmatmul.mubr.f32.gmra.mxu0 %v436
    %v617 = vpop.f32.mrf.mxu0
    %v618 = vadd.f32 %v432, %v617
    %v619 = vpop.f32.mrf.mxu0
    %620 = vdwg.mxu0
    %vm621 = vcmp.gt.f32.partialorder %v618, 0.0
    %v622 = vsel %vm621, 1, 0
    %v623 = vcvt.s32.f32 %v622
    %625 = vrot.lane.b32.xlu0 %v623, 16
    %v626 = vpop.permute.xlu0 %625
    %vm628 = vcmask 130048
    %v629 = vsel %vm628, %v510, %v626
    %vm630 = vcmask 254976
    %631 = vst.msk [vmem:[#allocation5] sm:$0x3] %vm630, %v629
    // Predicated region
    $region30: #{tpu_custom_call.1} parent=1 // pred_check
      _
    $region31: #{tpu_custom_call.1} parent=1 // pred_check_branch
      %633 = sbr.rel (0) target = $region33
    $region32: #{tpu_custom_call.1} parent=1 // pred_region
      %s635 = ssub.s32 32, 32
      %636 = vsyncadd [#allocation4], %s635
      %s638 = sshll.u32 [#allocation5], 4
      %s639 = int_to_ptr.vmem [resolvable:$true] %s638
      %641 = dma.vmem_to_hbm [thread:$0]  %s639, 32, %s6, [#allocation4]
    $region33: #{tpu_custom_call.1} parent=1 // pred_fallthru
      _
    // Predicated region
    $region34: #{tpu_custom_call.1} parent=1 // pred_check
      _
    $region35: #{tpu_custom_call.1} parent=1 // pred_check_branch
      %643 = sbr.rel (0) target = $region37
    $region36: #{tpu_custom_call.1} parent=1 // pred_region
      %644 = dma.done [#allocation4], 32
    $region37: #{tpu_custom_call.1} parent=1 // pred_fallthru
      _
    %645 = vsyncpa [#allocation3], 1
    %646 = vsyncpa [#allocation4], 1

</llo_original>
